<compile_context>
chip_gen: v5e
topology: v5e:2x2
jax: 0.10.0
libtpu: 0.0.40
codegen_flags: <defaults>
</compile_context>

<pallas_src>
import jax
import jax.numpy as jnp
from jax.experimental import pallas as pl
from jax.experimental.pallas import tpu as pltpu

HIDDEN = 512
MAX_TB = 2048  # cap per-step batch tile (VMEM-safe on v5e/v6e/v7x)


def _round_up(n, m):
    return ((n + m - 1) // m) * m


def label_net_kernel(x_ref, w1_ref, b1_ref, w2_ref, b2_ref, o_ref):
    # Layer 1: cast x to bf16 in-kernel (cheap VPU op), MXU matmul with f32 acc.
    x = x_ref[...].astype(jnp.bfloat16)
    h = jnp.dot(x, w1_ref[...], preferred_element_type=jnp.float32)
    h = jnp.maximum(h + b1_ref[...], 0.0)
    # Layer 2: bf16 MXU matmul with f32 acc; bias + tanh in f32 (EUP).
    y = jnp.dot(h.astype(jnp.bfloat16), w2_ref[...], preferred_element_type=jnp.float32)
    o_ref[...] = jnp.tanh(y + b2_ref[...]).astype(o_ref.dtype)


def prepare_label_net_params(w1, b1, w2, b2):
    """One-time weight prep (hoisted out of the per-call forward):
    bf16 MXU weights, f32 row-vector biases."""
    w1p = w1.astype(jnp.bfloat16)
    w2p = w2.astype(jnp.bfloat16)
    b1p = b1.reshape(1, -1).astype(jnp.float32)
    b2p = b2.reshape(1, -1).astype(jnp.float32)
    return w1p, b1p, w2p, b2p


def _choose_tb(B, max_tb=MAX_TB):
    """Pick the batch tile: one block for small B; >=2 steps (v7x dual-TC) and
    multiple-of-256 tiles (full MXU M) for large B, capped for VMEM."""
    if B <= 256:
        return _round_up(max(B, 8), 8)
    target_steps = max(2, -(-B // max_tb))  # ceil-div, at least 2 grid steps
    tb = _round_up(-(-B // target_steps), 256)
    return min(tb, max_tb)


def label_net_forward(x, w1p, b1p, w2p, b2p):
    """x: (B, label_dim) f32 -> (B, bit) f32.
    w1p:(label_dim,512) bf16, b1p:(1,512) f32, w2p:(512,bit) bf16, b2p:(1,bit) f32."""
    B, label_dim = x.shape
    hidden = w1p.shape[1]
    bit = w2p.shape[1]
    assert w1p.shape == (label_dim, hidden)
    assert b1p.shape == (1, hidden)
    assert w2p.shape == (hidden, bit)
    assert b2p.shape == (1, bit)

    tb = _choose_tb(B)
    b_pad = _round_up(B, tb)
    if b_pad > B:
        x = jnp.pad(x, ((0, b_pad - B), (0, 0)))

    grid = (b_pad // tb,)

    # Advisory cost estimate from REAL (unpadded) sizes.
    flops = 2 * B * (label_dim * hidden + hidden * bit)
    transcendentals = B * bit  # tanh
    bytes_accessed = (
        B * label_dim * 4            # x (f32 in)
        + w1p.size * 2 + w2p.size * 2  # bf16 weights
        + b1p.size * 4 + b2p.size * 4  # f32 biases
        + B * bit * 4                # output (f32)
    )

    out = pl.pallas_call(
        label_net_kernel,
        out_shape=jax.ShapeDtypeStruct((b_pad, bit), jnp.float32),
        grid_spec=pl.GridSpec(
            grid=grid,
            in_specs=[
                # x tile: last dim == full array dim (label_dim) -> lane-rule exempt.
                pl.BlockSpec((tb, label_dim), lambda i: (i, 0)),
                pl.BlockSpec((label_dim, hidden), lambda i: (0, 0)),  # W1 (VMEM-resident)
                pl.BlockSpec((1, hidden), lambda i: (0, 0)),          # b1
                pl.BlockSpec((hidden, bit), lambda i: (0, 0)),        # W2 (VMEM-resident)
                pl.BlockSpec((1, bit), lambda i: (0, 0)),             # b2
            ],
            # Output: only the real `bit` columns (last dim == full array dim).
            out_specs=pl.BlockSpec((tb, bit), lambda i: (i, 0)),
        ),
        compiler_params=pltpu.CompilerParams(
            dimension_semantics=("parallel",),
        ),
        cost_estimate=pl.CostEstimate(
            flops=flops,
            transcendentals=transcendentals,
            bytes_accessed=bytes_accessed,
        ),
    )(x, w1p, b1p, w2p, b2p)

    return out[:B] if b_pad > B else out


def init_label_net_params(key, label_dim, bit, hidden=HIDDEN, dtype=jnp.float32):
    """Mimics PyTorch nn.Linear default init: U(-1/sqrt(fan_in), 1/sqrt(fan_in))."""
    k1, k2, k3, k4 = jax.random.split(key, 4)
    bound1 = 1.0 / jnp.sqrt(label_dim)
    bound2 = 1.0 / jnp.sqrt(hidden)
    w1 = jax.random.uniform(k1, (label_dim, hidden), dtype, -bound1, bound1)
    b1 = jax.random.uniform(k2, (1, hidden), dtype, -bound1, bound1)
    w2 = jax.random.uniform(k3, (hidden, bit), dtype, -bound2, bound2)
    b2 = jax.random.uniform(k4, (1, bit), dtype, -bound2, bound2)
    return w1, b1, w2, b2


def _reference(x, w1, b1, w2, b2):
    # Plain-JAX f32 reference: tanh(relu(x @ W1 + b1) @ W2 + b2)
    return jnp.tanh(jnp.maximum(x @ w1 + b1, 0.0) @ w2 + b2)


if __name__ == "__main__":
    key = jax.random.PRNGKey(0)
    k_params, k_x1, k_x2 = jax.random.split(key, 3)

    label_dim = 24   # dimension of tags
    bit = 32         # bit number of the final binary code
    w1, b1, w2, b2 = init_label_net_params(k_params, label_dim, bit)
    # One-time weight prep (bf16 cast hoisted out of the forward).
    w1p, b1p, w2p, b2p = prepare_label_net_params(w1, b1, w2, b2)

    # Small batch (single grid step, tb == 8).
    x_small = jax.random.normal(k_x1, (8, label_dim), jnp.float32)
    y_small = jax.block_until_ready(label_net_forward(x_small, w1p, b1p, w2p, b2p))
    ref_small = _reference(x_small, w1, b1, w2, b2)
    assert y_small.shape == (8, bit)
    # bf16 MXU operands -> loosened tolerance vs the f32 reference.
    assert jnp.allclose(y_small, ref_small, atol=5e-2, rtol=5e-2)

    # Larger batch exercising the tiled/pipelined grid path (tb=256 -> grid=(2,)).
    x_big = jax.random.normal(k_x2, (512, label_dim), jnp.float32)
    y_big = jax.block_until_ready(label_net_forward(x_big, w1p, b1p, w2p, b2p))
    ref_big = _reference(x_big, w1, b1, w2, b2)
    assert y_big.shape == (512, bit)
    assert jnp.allclose(y_big, ref_big, atol=5e-2, rtol=5e-2)

    print("KERNEL_OK")
</pallas_src>

<mosaic_0001>
module attributes {stable_mosaic.version = 11 : i64} {
  func.func @label_net_kernel(%arg0: i32, %arg1: memref<8x24xf32, #tpu.memory_space<vmem>>, %arg2: memref<24x512xbf16, #tpu.memory_space<vmem>>, %arg3: memref<1x512xf32, #tpu.memory_space<vmem>>, %arg4: memref<512x32xbf16, #tpu.memory_space<vmem>>, %arg5: memref<1x32xf32, #tpu.memory_space<vmem>>, %arg6: memref<8x32xf32, #tpu.memory_space<vmem>>) attributes {dimension_semantics = [#tpu.dimension_semantics<parallel>], iteration_bounds = array<i64: 1>, scalar_prefetch = 0 : i64, scratch_operands = 0 : i64, tpu.core_type = #tpu.core_type<tc>, window_params = [{transform_indices = @transform_0, window_bounds = array<i64: 8, 24>}, {pipeline_mode = #tpu.pipeline_mode<synchronous>, transform_indices = @transform_1, window_bounds = array<i64: 24, 512>}, {pipeline_mode = #tpu.pipeline_mode<synchronous>, transform_indices = @transform_2, window_bounds = array<i64: 1, 512>}, {pipeline_mode = #tpu.pipeline_mode<synchronous>, transform_indices = @transform_3, window_bounds = array<i64: 512, 32>}, {pipeline_mode = #tpu.pipeline_mode<synchronous>, transform_indices = @transform_4, window_bounds = array<i64: 1, 32>}, {transform_indices = @transform_5, window_bounds = array<i64: 8, 32>}]} {
    %c0 = arith.constant 0 : index
    %c0_0 = arith.constant 0 : index
    %0 = vector.load %arg1[%c0, %c0_0] : memref<8x24xf32, #tpu.memory_space<vmem>>, vector<8x24xf32>
    %1 = arith.truncf %0 : vector<8x24xf32> to vector<8x24xbf16>
    %c0_1 = arith.constant 0 : index
    %c0_2 = arith.constant 0 : index
    %2 = vector.load %arg2[%c0_1, %c0_2] : memref<24x512xbf16, #tpu.memory_space<vmem>>, vector<24x512xbf16>
    %cst = arith.constant dense<0.000000e+00> : vector<8x512xf32>
    %3 = tpu.matmul %1, %2, %cst {dimension_numbers = #tpu.dot_dimension_numbers<[1], [0], [0], [1], [0, 0, 1, 1], [], []>} : vector<8x24xbf16>, vector<24x512xbf16>, vector<8x512xf32> -> vector<8x512xf32>
    %c0_3 = arith.constant 0 : index
    %c0_4 = arith.constant 0 : index
    %4 = vector.load %arg3[%c0_3, %c0_4] : memref<1x512xf32, #tpu.memory_space<vmem>>, vector<1x512xf32>
    %5 = vector.broadcast %4 : vector<1x512xf32> to vector<8x512xf32>
    %6 = arith.addf %3, %5 : vector<8x512xf32>
    %cst_5 = arith.constant 0.000000e+00 : f32
    %7 = vector.broadcast %cst_5 : f32 to vector<8x512xf32>
    %8 = arith.maximumf %6, %7 : vector<8x512xf32>
    %9 = arith.truncf %8 : vector<8x512xf32> to vector<8x512xbf16>
    %c0_6 = arith.constant 0 : index
    %c0_7 = arith.constant 0 : index
    %10 = vector.load %arg4[%c0_6, %c0_7] : memref<512x32xbf16, #tpu.memory_space<vmem>>, vector<512x32xbf16>
    %cst_8 = arith.constant dense<0.000000e+00> : vector<8x32xf32>
    %11 = tpu.matmul %9, %10, %cst_8 {dimension_numbers = #tpu.dot_dimension_numbers<[1], [0], [0], [1], [0, 0, 1, 1], [], []>} : vector<8x512xbf16>, vector<512x32xbf16>, vector<8x32xf32> -> vector<8x32xf32>
    %c0_9 = arith.constant 0 : index
    %c0_10 = arith.constant 0 : index
    %12 = vector.load %arg5[%c0_9, %c0_10] : memref<1x32xf32, #tpu.memory_space<vmem>>, vector<1x32xf32>
    %13 = vector.broadcast %12 : vector<1x32xf32> to vector<8x32xf32>
    %14 = arith.addf %11, %13 : vector<8x32xf32>
    %15 = math.tanh %14 : vector<8x32xf32>
    %c0_11 = arith.constant 0 : index
    %c0_12 = arith.constant 0 : index
    %16 = vector.load %arg6[%c0_11, %c0_12] : memref<8x32xf32, #tpu.memory_space<vmem>>, vector<8x32xf32>
    tpu.vector_store %arg6[%c0_11, %c0_12], %15 {strides = array<i32>} : memref<8x32xf32, #tpu.memory_space<vmem>>, vector<8x32xf32>,
    return
  }
  func.func @transform_0(%arg0: i32) -> (i32, i32) {
    %c0_i32 = arith.constant 0 : i32
    %c0_i32_0 = arith.constant 0 : i32
    return %arg0, %c0_i32 : i32, i32
  }
  func.func @transform_1(%arg0: i32) -> (i32, i32) {
    %c0_i32 = arith.constant 0 : i32
    %c0_i32_0 = arith.constant 0 : i32
    %c0_i32_1 = arith.constant 0 : i32
    return %c0_i32, %c0_i32_0 : i32, i32
  }
  func.func @transform_2(%arg0: i32) -> (i32, i32) {
    %c0_i32 = arith.constant 0 : i32
    %c0_i32_0 = arith.constant 0 : i32
    %c0_i32_1 = arith.constant 0 : i32
    return %c0_i32, %c0_i32_0 : i32, i32
  }
  func.func @transform_3(%arg0: i32) -> (i32, i32) {
    %c0_i32 = arith.constant 0 : i32
    %c0_i32_0 = arith.constant 0 : i32
    %c0_i32_1 = arith.constant 0 : i32
    return %c0_i32, %c0_i32_0 : i32, i32
  }
  func.func @transform_4(%arg0: i32) -> (i32, i32) {
    %c0_i32 = arith.constant 0 : i32
    %c0_i32_0 = arith.constant 0 : i32
    %c0_i32_1 = arith.constant 0 : i32
    return %c0_i32, %c0_i32_0 : i32, i32
  }
  func.func @transform_5(%arg0: i32) -> (i32, i32) {
    %c0_i32 = arith.constant 0 : i32
    %c0_i32_0 = arith.constant 0 : i32
    return %arg0, %c0_i32 : i32, i32
  }
}

</mosaic_0001>

<llo_original>
// kernel: tpu_custom_call.1
$region0: #{tpu_custom_call.1}
  #allocation0 [shape = 'u32[]', space=smem, size = 0x4, offset = 0x4, fixed_abs, tag = 'smem constant byte address 0x4 - core index']
  #allocation1 [shape = 'u32[72,128]{1,0:T(1,128)}', space=vmem, size = 0x9000, scoped, tag = 'internal scratch']
  %s0 = inlined_call_operand.vmem [shape: f32[8,24], index: 0, kind: input, shape index: {}]
  %s1 = inlined_call_operand.vmem [shape: bf16[24,512], index: 1, kind: input, shape index: {}]
  %s2 = inlined_call_operand.vmem [shape: f32[1,512], index: 2, kind: input, shape index: {}]
  %s3 = inlined_call_operand.vmem [shape: bf16[512,32], index: 3, kind: input, shape index: {}]
  %s4 = inlined_call_operand.vmem [shape: f32[1,32], index: 4, kind: input, shape index: {}]
  %s5 = inlined_call_operand.hbm [shape: f32[8,32], index: 5, kind: output, shape index: {}]
  %s6 = sld [smem:[#allocation0]]
  $region30: #{tpu_custom_call.1} parent=0
    _
  %s8 = ssub.s32 1, %s6
  %s9 = scalar_select 0, %s8, %s6
  $region1: #{tpu_custom_call.1} parent=0
    #allocation2 [shape = 'u8[4096]{0}', space=vmem, size = 0x1000, scoped, tag = 'output window, operand 0, single buffered']
    #allocation3 [shape = 's32[1]{0}', space=sflag, size = 0x4, scoped, tag = 'scoped memory for tpu_custom_call.1']
    %10 = vsyncpa [#allocation3], 0
    // Predicated region
    $region2: #{tpu_custom_call.1} parent=1 // pred_check
      _
    $region3: #{tpu_custom_call.1} parent=1 // pred_check_branch
      %12 = sbr.rel (0) target = $region5
    $region4: #{tpu_custom_call.1} parent=1 // pred_region
      _
    $region5: #{tpu_custom_call.1} parent=1 // pred_fallthru
      _
    // Predicated region
    $region6: #{tpu_custom_call.1} parent=1 // pred_check
      _
    $region7: #{tpu_custom_call.1} parent=1 // pred_check_branch
      %14 = sbr.rel (0) target = $region9
    $region8: #{tpu_custom_call.1} parent=1 // pred_region
      _
    $region9: #{tpu_custom_call.1} parent=1 // pred_fallthru
      _
    // Predicated region
    $region10: #{tpu_custom_call.1} parent=1 // pred_check
      _
    $region11: #{tpu_custom_call.1} parent=1 // pred_check_branch
      %16 = sbr.rel (0) target = $region13
    $region12: #{tpu_custom_call.1} parent=1 // pred_region
      _
    $region13: #{tpu_custom_call.1} parent=1 // pred_fallthru
      _
    // Predicated region
    $region14: #{tpu_custom_call.1} parent=1 // pred_check
      _
    $region15: #{tpu_custom_call.1} parent=1 // pred_check_branch
      %18 = sbr.rel (0) target = $region17
    $region16: #{tpu_custom_call.1} parent=1 // pred_region
      _
    $region17: #{tpu_custom_call.1} parent=1 // pred_fallthru
      _
    // Predicated region
    $region18: #{tpu_custom_call.1} parent=1 // pred_check
      _
    $region19: #{tpu_custom_call.1} parent=1 // pred_check_branch
      %20 = sbr.rel (0) target = $region21
    $region20: #{tpu_custom_call.1} parent=1 // pred_region
      _
    $region21: #{tpu_custom_call.1} parent=1 // pred_fallthru
      _
    %v22 = vld [vmem:[%s0] sm:$0xff]
    %v23 = vpack.c.bf16 %v22, %v22
    %v24 = vld [vmem:[%s1] sm:$0xff]
    %v25 = vld [vmem:[%s1 + $0x8] sm:$0xff]
    %v26 = vld [vmem:[%s1 + $0x10] sm:$0xff]
    %v27 = vld [vmem:[%s1 + $0x18] sm:$0xff]
    %v28 = vld [vmem:[%s1 + $0x20] sm:$0xff]
    %v29 = vld [vmem:[%s1 + $0x28] sm:$0xff]
    %v30 = vld [vmem:[%s2] sm:$0xf]
    %v32 = vperm.slane %v30, 0
    %v33 = vperm.slane %v30, 1
    %v34 = vperm.slane %v30, 2
    %v35 = vperm.slane %v30, 3
    %v46 = vunpack.c.l.b16 %v24
    %v47 = vunpack.c.h.b16 %v24
    %v48 = vunpack.c.l.b16 %v25
    %v49 = vunpack.c.h.b16 %v25
    %v50 = vunpack.c.l.b16 %v26
    %v51 = vunpack.c.h.b16 %v26
    %v52 = vunpack.c.l.b16 %v27
    %v53 = vunpack.c.h.b16 %v27
    %v54 = vunpack.c.l.b16 %v28
    %v55 = vunpack.c.h.b16 %v28
    %v56 = vunpack.c.l.b16 %v29
    %v57 = vunpack.c.h.b16 %v29
    %v58 = vpack.c.b16 %v50, %v46
    %v59 = vpack.c.b16 %v51, %v47
    %v60 = vpack.c.b16 %v52, %v48
    %v61 = vpack.c.b16 %v53, %v49
    %v62 = vpack.c.b16 %v54, %v54
    %v63 = vpack.c.b16 %v55, %v55
    %v64 = vpack.c.b16 %v56, %v56
    %v65 = vpack.c.b16 %v57, %v57
    %vm70 = vcmask 195584
    %v72 = vsel %vm70, %v23, 0
    %vm74 = vcmask 1043456
    %v76 = vsel %vm74, %v62, 0
    %v79 = vsel %vm74, %v63, 0
    %v82 = vsel %vm74, %v64, 0
    %v85 = vsel %vm74, %v65, 0
    %87 = vmatpush.bf16.msra.mxu0 0
    %88 = vmatpush.bf16.msra.mxu0 0
    %89 = vmatpush.bf16.msra.mxu0 0
    %90 = vmatpush.bf16.msra.mxu0 0
    %91 = vmatpush.bf16.msra.mxu0 0
    %92 = vmatpush.bf16.msra.mxu0 0
    %93 = vmatpush.bf16.msra.mxu0 %v76
    %94 = vmatpush.bf16.msra.mxu0 %v58
    %95 = vmatmul.bf16.gmra.mxu0 %v72
    %v96 = vpop.f32.mrf.mxu0
    %v97 = vadd.f32 %v32, %v96
    %v98 = vpop.f32.mrf.mxu0
    %99 = vdwg.mxu0
    %100 = vmatpush.bf16.msra.mxu0 0
    %101 = vmatpush.bf16.msra.mxu0 0
    %102 = vmatpush.bf16.msra.mxu0 0
    %103 = vmatpush.bf16.msra.mxu0 0
    %104 = vmatpush.bf16.msra.mxu0 0
    %105 = vmatpush.bf16.msra.mxu0 0
    %106 = vmatpush.bf16.msra.mxu0 %v79
    %107 = vmatpush.bf16.msra.mxu0 %v59
    %108 = vmatmul.bf16.gmra.mxu0 %v72
    %v109 = vpop.f32.mrf.mxu0
    %v110 = vadd.f32 %v33, %v109
    %v111 = vpop.f32.mrf.mxu0
    %112 = vdwg.mxu0
    %113 = vmatpush.bf16.msra.mxu0 0
    %114 = vmatpush.bf16.msra.mxu0 0
    %115 = vmatpush.bf16.msra.mxu0 0
    %116 = vmatpush.bf16.msra.mxu0 0
    %117 = vmatpush.bf16.msra.mxu0 0
    %118 = vmatpush.bf16.msra.mxu0 0
    %119 = vmatpush.bf16.msra.mxu0 %v82
    %120 = vmatpush.bf16.msra.mxu0 %v60
    %121 = vmatmul.bf16.gmra.mxu0 %v72
    %v122 = vpop.f32.mrf.mxu0
    %v123 = vadd.f32 %v34, %v122
    %v124 = vpop.f32.mrf.mxu0
    %125 = vdwg.mxu0
    %126 = vmatpush.bf16.msra.mxu0 0
    %127 = vmatpush.bf16.msra.mxu0 0
    %128 = vmatpush.bf16.msra.mxu0 0
    %129 = vmatpush.bf16.msra.mxu0 0
    %130 = vmatpush.bf16.msra.mxu0 0
    %131 = vmatpush.bf16.msra.mxu0 0
    %132 = vmatpush.bf16.msra.mxu0 %v85
    %133 = vmatpush.bf16.msra.mxu0 %v61
    %134 = vmatmul.bf16.gmra.mxu0 %v72
    %v135 = vpop.f32.mrf.mxu0
    %v136 = vadd.f32 %v35, %v135
    %v137 = vpop.f32.mrf.mxu0
    %138 = vdwg.mxu0
    %v139 = vmax.f32 %v97, 0.0
    %v140 = vmax.f32 %v110, 0.0
    %v141 = vmax.f32 %v123, 0.0
    %v142 = vmax.f32 %v136, 0.0
    %v143 = vpack.c.bf16 %v139, %v139
    %v144 = vpack.c.bf16 %v140, %v140
    %v145 = vpack.c.bf16 %v141, %v141
    %v146 = vpack.c.bf16 %v142, %v142
    %v147 = vld [vmem:[%s3] sm:$0xf]
    %v148 = vld [vmem:[%s3 + $0x4] sm:$0xf]
    %v149 = vld [vmem:[%s3 + $0x8] sm:$0xf]
    %v150 = vld [vmem:[%s3 + $0xc] sm:$0xf]
    %v151 = vld [vmem:[%s3 + $0x10] sm:$0xf]
    %v152 = vld [vmem:[%s3 + $0x14] sm:$0xf]
    %v153 = vld [vmem:[%s3 + $0x18] sm:$0xf]
    %v154 = vld [vmem:[%s3 + $0x1c] sm:$0xf]
    %v155 = vld [vmem:[%s3 + $0x20] sm:$0xf]
    %v156 = vld [vmem:[%s3 + $0x24] sm:$0xf]
    %v157 = vld [vmem:[%s3 + $0x28] sm:$0xf]
    %v158 = vld [vmem:[%s3 + $0x2c] sm:$0xf]
    %v159 = vld [vmem:[%s3 + $0x30] sm:$0xf]
    %v160 = vld [vmem:[%s3 + $0x34] sm:$0xf]
    %v161 = vld [vmem:[%s3 + $0x38] sm:$0xf]
    %v162 = vld [vmem:[%s3 + $0x3c] sm:$0xf]
    %v163 = vld [vmem:[%s3 + $0x40] sm:$0xf]
    %v164 = vld [vmem:[%s3 + $0x44] sm:$0xf]
    %v165 = vld [vmem:[%s3 + $0x48] sm:$0xf]
    %v166 = vld [vmem:[%s3 + $0x4c] sm:$0xf]
    %v167 = vld [vmem:[%s3 + $0x50] sm:$0xf]
    %v168 = vld [vmem:[%s3 + $0x54] sm:$0xf]
    %v169 = vld [vmem:[%s3 + $0x58] sm:$0xf]
    %v170 = vld [vmem:[%s3 + $0x5c] sm:$0xf]
    %v171 = vld [vmem:[%s3 + $0x60] sm:$0xf]
    %v172 = vld [vmem:[%s3 + $0x64] sm:$0xf]
    %v173 = vld [vmem:[%s3 + $0x68] sm:$0xf]
    %v174 = vld [vmem:[%s3 + $0x6c] sm:$0xf]
    %v175 = vld [vmem:[%s3 + $0x70] sm:$0xf]
    %v176 = vld [vmem:[%s3 + $0x74] sm:$0xf]
    %v177 = vld [vmem:[%s3 + $0x78] sm:$0xf]
    %v178 = vld [vmem:[%s3 + $0x7c] sm:$0xf]
    %v179 = vld [vmem:[%s3 + $0x80] sm:$0xf]
    %v180 = vld [vmem:[%s3 + $0x84] sm:$0xf]
    %v181 = vld [vmem:[%s3 + $0x88] sm:$0xf]
    %v182 = vld [vmem:[%s3 + $0x8c] sm:$0xf]
    %v183 = vld [vmem:[%s3 + $0x90] sm:$0xf]
    %v184 = vld [vmem:[%s3 + $0x94] sm:$0xf]
    %v185 = vld [vmem:[%s3 + $0x98] sm:$0xf]
    %v186 = vld [vmem:[%s3 + $0x9c] sm:$0xf]
    %v187 = vld [vmem:[%s3 + $0xa0] sm:$0xf]
    %v188 = vld [vmem:[%s3 + $0xa4] sm:$0xf]
    %v189 = vld [vmem:[%s3 + $0xa8] sm:$0xf]
    %v190 = vld [vmem:[%s3 + $0xac] sm:$0xf]
    %v191 = vld [vmem:[%s3 + $0xb0] sm:$0xf]
    %v192 = vld [vmem:[%s3 + $0xb4] sm:$0xf]
    %v193 = vld [vmem:[%s3 + $0xb8] sm:$0xf]
    %v194 = vld [vmem:[%s3 + $0xbc] sm:$0xf]
    %v195 = vld [vmem:[%s3 + $0xc0] sm:$0xf]
    %v196 = vld [vmem:[%s3 + $0xc4] sm:$0xf]
    %v197 = vld [vmem:[%s3 + $0xc8] sm:$0xf]
    %v198 = vld [vmem:[%s3 + $0xcc] sm:$0xf]
    %v199 = vld [vmem:[%s3 + $0xd0] sm:$0xf]
    %v200 = vld [vmem:[%s3 + $0xd4] sm:$0xf]
    %v201 = vld [vmem:[%s3 + $0xd8] sm:$0xf]
    %v202 = vld [vmem:[%s3 + $0xdc] sm:$0xf]
    %v203 = vld [vmem:[%s3 + $0xe0] sm:$0xf]
    %v204 = vld [vmem:[%s3 + $0xe4] sm:$0xf]
    %v205 = vld [vmem:[%s3 + $0xe8] sm:$0xf]
    %v206 = vld [vmem:[%s3 + $0xec] sm:$0xf]
    %v207 = vld [vmem:[%s3 + $0xf0] sm:$0xf]
    %v208 = vld [vmem:[%s3 + $0xf4] sm:$0xf]
    %v209 = vld [vmem:[%s3 + $0xf8] sm:$0xf]
    %v210 = vld [vmem:[%s3 + $0xfc] sm:$0xf]
    %v211 = vld [vmem:[%s4] sm:$0x1]
    %v213 = vperm.slane %v211, 0
    %v279 = vunpack.c.l.b16 %v147
    %v280 = vunpack.c.l.b16 %v148
    %v281 = vunpack.c.l.b16 %v149
    %v282 = vunpack.c.l.b16 %v150
    %v283 = vunpack.c.l.b16 %v151
    %v284 = vunpack.c.l.b16 %v152
    %v285 = vunpack.c.l.b16 %v153
    %v286 = vunpack.c.l.b16 %v154
    %v287 = vunpack.c.l.b16 %v155
    %v288 = vunpack.c.l.b16 %v156
    %v289 = vunpack.c.l.b16 %v157
    %v290 = vunpack.c.l.b16 %v158
    %v291 = vunpack.c.l.b16 %v159
    %v292 = vunpack.c.l.b16 %v160
    %v293 = vunpack.c.l.b16 %v161
    %v294 = vunpack.c.l.b16 %v162
    %v295 = vunpack.c.l.b16 %v163
    %v296 = vunpack.c.l.b16 %v164
    %v297 = vunpack.c.l.b16 %v165
    %v298 = vunpack.c.l.b16 %v166
    %v299 = vunpack.c.l.b16 %v167
    %v300 = vunpack.c.l.b16 %v168
    %v301 = vunpack.c.l.b16 %v169
    %v302 = vunpack.c.l.b16 %v170
    %v303 = vunpack.c.l.b16 %v171
    %v304 = vunpack.c.l.b16 %v172
    %v305 = vunpack.c.l.b16 %v173
    %v306 = vunpack.c.l.b16 %v174
    %v307 = vunpack.c.l.b16 %v175
    %v308 = vunpack.c.l.b16 %v176
    %v309 = vunpack.c.l.b16 %v177
    %v310 = vunpack.c.l.b16 %v178
    %v311 = vunpack.c.l.b16 %v179
    %v312 = vunpack.c.l.b16 %v180
    %v313 = vunpack.c.l.b16 %v181
    %v314 = vunpack.c.l.b16 %v182
    %v315 = vunpack.c.l.b16 %v183
    %v316 = vunpack.c.l.b16 %v184
    %v317 = vunpack.c.l.b16 %v185
    %v318 = vunpack.c.l.b16 %v186
    %v319 = vunpack.c.l.b16 %v187
    %v320 = vunpack.c.l.b16 %v188
    %v321 = vunpack.c.l.b16 %v189
    %v322 = vunpack.c.l.b16 %v190
    %v323 = vunpack.c.l.b16 %v191
    %v324 = vunpack.c.l.b16 %v192
    %v325 = vunpack.c.l.b16 %v193
    %v326 = vunpack.c.l.b16 %v194
    %v327 = vunpack.c.l.b16 %v195
    %v328 = vunpack.c.l.b16 %v196
    %v329 = vunpack.c.l.b16 %v197
    %v330 = vunpack.c.l.b16 %v198
    %v331 = vunpack.c.l.b16 %v199
    %v332 = vunpack.c.l.b16 %v200
    %v333 = vunpack.c.l.b16 %v201
    %v334 = vunpack.c.l.b16 %v202
    %v335 = vunpack.c.l.b16 %v203
    %v336 = vunpack.c.l.b16 %v204
    %v337 = vunpack.c.l.b16 %v205
    %v338 = vunpack.c.l.b16 %v206
    %v339 = vunpack.c.l.b16 %v207
    %v340 = vunpack.c.l.b16 %v208
    %v341 = vunpack.c.l.b16 %v209
    %v342 = vunpack.c.l.b16 %v210
    %v343 = vpack.c.b16 %v280, %v279
    %v344 = vpack.c.b16 %v282, %v281
    %v345 = vpack.c.b16 %v284, %v283
    %v346 = vpack.c.b16 %v286, %v285
    %v347 = vpack.c.b16 %v288, %v287
    %v348 = vpack.c.b16 %v290, %v289
    %v349 = vpack.c.b16 %v292, %v291
    %v350 = vpack.c.b16 %v294, %v293
    %v351 = vpack.c.b16 %v296, %v295
    %v352 = vpack.c.b16 %v298, %v297
    %v353 = vpack.c.b16 %v300, %v299
    %v354 = vpack.c.b16 %v302, %v301
    %v355 = vpack.c.b16 %v304, %v303
    %v356 = vpack.c.b16 %v306, %v305
    %v357 = vpack.c.b16 %v308, %v307
    %v358 = vpack.c.b16 %v310, %v309
    %v359 = vpack.c.b16 %v312, %v311
    %v360 = vpack.c.b16 %v314, %v313
    %v361 = vpack.c.b16 %v316, %v315
    %v362 = vpack.c.b16 %v318, %v317
    %v363 = vpack.c.b16 %v320, %v319
    %v364 = vpack.c.b16 %v322, %v321
    %v365 = vpack.c.b16 %v324, %v323
    %v366 = vpack.c.b16 %v326, %v325
    %v367 = vpack.c.b16 %v328, %v327
    %v368 = vpack.c.b16 %v330, %v329
    %v369 = vpack.c.b16 %v332, %v331
    %v370 = vpack.c.b16 %v334, %v333
    %v371 = vpack.c.b16 %v336, %v335
    %v372 = vpack.c.b16 %v338, %v337
    %v373 = vpack.c.b16 %v340, %v339
    %v374 = vpack.c.b16 %v342, %v341
    %407 = vmatpush.bf16.msra.mxu0 %v350
    %408 = vmatpush.bf16.msra.mxu0 %v349
    %409 = vmatpush.bf16.msra.mxu0 %v348
    %410 = vmatpush.bf16.msra.mxu0 %v347
    %411 = vmatpush.bf16.msra.mxu0 %v346
    %412 = vmatpush.bf16.msra.mxu0 %v345
    %413 = vmatpush.bf16.msra.mxu0 %v344
    %414 = vmatpush.bf16.msra.mxu0 %v343
    %415 = vmatmul.bf16.gmra.mxu0 %v143
    %v416 = vpop.f32.mrf.mxu0
    %v417 = vadd.f32 %v213, %v416
    %v418 = vpop.f32.mrf.mxu0
    %419 = vdwg.mxu0
    %420 = vmatpush.bf16.msra.mxu0 %v358
    %421 = vmatpush.bf16.msra.mxu0 %v357
    %422 = vmatpush.bf16.msra.mxu0 %v356
    %423 = vmatpush.bf16.msra.mxu0 %v355
    %424 = vmatpush.bf16.msra.mxu0 %v354
    %425 = vmatpush.bf16.msra.mxu0 %v353
    %426 = vmatpush.bf16.msra.mxu0 %v352
    %427 = vmatpush.bf16.msra.mxu0 %v351
    %428 = vmatmul.bf16.gmra.mxu0 %v144
    %v429 = vpop.f32.mrf.mxu0
    %v430 = vadd.f32 %v417, %v429
    %v431 = vpop.f32.mrf.mxu0
    %432 = vdwg.mxu0
    %433 = vmatpush.bf16.msra.mxu0 %v366
    %434 = vmatpush.bf16.msra.mxu0 %v365
    %435 = vmatpush.bf16.msra.mxu0 %v364
    %436 = vmatpush.bf16.msra.mxu0 %v363
    %437 = vmatpush.bf16.msra.mxu0 %v362
    %438 = vmatpush.bf16.msra.mxu0 %v361
    %439 = vmatpush.bf16.msra.mxu0 %v360
    %440 = vmatpush.bf16.msra.mxu0 %v359
    %441 = vmatmul.bf16.gmra.mxu0 %v145
    %v442 = vpop.f32.mrf.mxu0
    %v443 = vadd.f32 %v430, %v442
    %v444 = vpop.f32.mrf.mxu0
    %445 = vdwg.mxu0
    %446 = vmatpush.bf16.msra.mxu0 %v374
    %447 = vmatpush.bf16.msra.mxu0 %v373
    %448 = vmatpush.bf16.msra.mxu0 %v372
    %449 = vmatpush.bf16.msra.mxu0 %v371
    %450 = vmatpush.bf16.msra.mxu0 %v370
    %451 = vmatpush.bf16.msra.mxu0 %v369
    %452 = vmatpush.bf16.msra.mxu0 %v368
    %453 = vmatpush.bf16.msra.mxu0 %v367
    %454 = vmatmul.bf16.gmra.mxu0 %v146
    %v455 = vpop.f32.mrf.mxu0
    %v456 = vadd.f32 %v443, %v455
    %v457 = vpop.f32.mrf.mxu0
    %458 = vdwg.mxu0
    %v459 = vtanh.pop %v456
    %vm460 = vcmask 261120
    %461 = vst.msk [vmem:[#allocation2] sm:$0xff] %vm460, %v459
    // Predicated region
    $region22: #{tpu_custom_call.1} parent=1 // pred_check
      _
    $region23: #{tpu_custom_call.1} parent=1 // pred_check_branch
      %463 = sbr.rel (0) target = $region25
    $region24: #{tpu_custom_call.1} parent=1 // pred_region
      %465 = vsyncadd [#allocation3], 0
      %s467 = sshll.u32 [#allocation2], 4
      %s468 = int_to_ptr.vmem [resolvable:$true] %s467
      %s469 = sshll.u32 %s5, 4
      %s470 = int_to_ptr.hbm [resolvable:$true] %s469
      %472 = dma.vmem_to_hbm [thread:$0]  %s468, 128, %s470, [#allocation3]
    $region25: #{tpu_custom_call.1} parent=1 // pred_fallthru
      _
    // Predicated region
    $region26: #{tpu_custom_call.1} parent=1 // pred_check
      _
    $region27: #{tpu_custom_call.1} parent=1 // pred_check_branch
      %474 = sbr.rel (0) target = $region29
    $region28: #{tpu_custom_call.1} parent=1 // pred_region
      %476 = dma.done [#allocation3], 128
    $region29: #{tpu_custom_call.1} parent=1 // pred_fallthru
      _
    %477 = vsyncpa [#allocation3], 1

</llo_original>
